<compile_context>
chip_gen: v7x
topology: tpu7x:2x2x1
jax: 0.10.0
libtpu: 0.0.40
codegen_flags: <defaults>
</compile_context>

<pallas_src>
import functools

import jax
import jax.numpy as jnp
import numpy as np
from jax import lax
from jax.experimental import pallas as pl
from jax.experimental.pallas import tpu as pltpu

TOPK = (1, 2, 3)

_LANES = 128
_SUBLANES = 8


def _cls_loss_kernel(logits_ref, target_ref, out_ref, *, topk, batch, block_rows):
    # Logits stay in their native dtype: bf16 compares/selects run at 2x VALU rate
    # on v6e/v7x and we avoid materializing a full f32 copy of every tile.
    x = logits_ref[...]                                      # [TB, C] native dtype
    tgt = target_ref[...]                                    # [TB, 1] int32
    TB, C = x.shape
    dt = x.dtype

    # Row-validity mask for the (possibly padded) last batch tile.
    row0 = pl.program_id(0) * block_rows
    row_ids = row0 + lax.broadcasted_iota(jnp.int32, (TB, 1), 0)
    valid = row_ids < batch                                   # [TB, 1] bool

    # (1, C) column iota, broadcast over rows by the compare (no (TB, C) i32 temp).
    col = lax.broadcasted_iota(jnp.int32, (1, C), 1)

    # Target logit: one-hot select on the VPU, masked-max reduce on the XLU.
    # Kept off the MXU on purpose: the value must be exact in every dtype because
    # it feeds the strictly-greater rank compare below.
    neg = jnp.asarray(jnp.finfo(dt).min, dt)
    t_val = jnp.max(jnp.where(col == tgt, x, neg), axis=-1, keepdims=True)  # [TB,1] native

    # Rank of the target logit = strictly-greater count (tie-free torch.topk
    # equivalent).  0/1 mask in bf16 (exact), lane reduction on the idle MXU.
    gt = (x > t_val).astype(jnp.bfloat16)                     # [TB, C] exact 0/1
    ones_b = jnp.ones((C, 1), jnp.bfloat16)
    rank = jnp.dot(gt, ones_b, preferred_element_type=jnp.float32)          # [TB,1] f32

    # Numerically-stable log-sum-exp: max on XLU, exp on EUP (f32 argument for
    # accuracy), lane sum offloaded to the MXU with a ones column.
    m = jnp.max(x, axis=-1, keepdims=True)                    # [TB, 1] native
    p = jnp.exp(x.astype(jnp.float32) - m.astype(jnp.float32))               # [TB,C] f32
    ones_f = jnp.ones((C, 1), jnp.float32)
    # NOTE: add precision=jax.lax.Precision.HIGHEST here if bit-exact f32
    # accumulation of the denominator is ever required.
    denom = jnp.dot(p, ones_f, preferred_element_type=jnp.float32)           # [TB,1] f32
    lse = jnp.log(denom) + m.astype(jnp.float32)              # [TB, 1] f32

    # Masked per-tile partial sums. jnp.where *selects* (not multiplies), so any
    # NaN/Inf living in OOB-padded rows cannot propagate into the sums.
    xe_sum = jnp.sum(jnp.where(valid, lse - t_val.astype(jnp.float32), 0.0))

    # Lane-dense (8,128) partial block: lane 0 = xe sum, lanes 1.. = top-k counts.
    lane = lax.broadcasted_iota(jnp.int32, (_SUBLANES, _LANES), 1)
    out = jnp.where(lane == 0, xe_sum, 0.0)
    for i, k in enumerate(topk):
        c_k = jnp.sum(jnp.where(valid & (rank < float(k)), 1.0, 0.0))
        out = out + jnp.where(lane == (i + 1), c_k, 0.0)
    out_ref[...] = out[None]                                   # (1, 8, 128)


def _tpu_generation():
    """Best-effort TPU generation (4..7); 0 if unknown.  Trace-time only."""
    try:
        kind = jax.devices()[0].device_kind.lower()
    except Exception:
        return 0
    for g in (7, 6, 5, 4):
        if ("v%d" % g) in kind:
            return g
    return 0


def _choose_block_rows(B, C, itemsize, gen):
    """Batch-tile height: dtype-packed sublane aligned, per-generation tile budget."""
    sub = _SUBLANES * max(1, 4 // itemsize)     # 8 rows f32, 16 rows bf16, 32 int8/fp8
    if B <= sub:
        return B                                # block == full array dim is always legal
    # v5e/v6e (128 MiB VMEM): bigger tiles amortize the ~0.35us/step grid overhead.
    # v7x / unknown (64 MiB VMEM): hold ~3 MiB so the f32 exp temporaries still fit.
    target_bytes = (6 << 20) if (gen and gen <= 6) else (3 << 20)
    tb = max(sub, min(B, target_bytes // max(1, C * itemsize)))
    tb = (tb // sub) * sub                      # dtype-packed sublane alignment
    return max(sub, min(tb, 2048))


def classification_loss(output, target, topk=TOPK):
    """output: [B, C] float logits (f32 or bf16); target: [B] int class labels."""
    B, C = output.shape
    itemsize = jnp.dtype(output.dtype).itemsize
    gen = _tpu_generation()
    tb = _choose_block_rows(B, C, itemsize, gen)
    num_tiles = pl.cdiv(B, tb)
    target_2d = target.astype(jnp.int32).reshape(B, 1)

    block_bytes = tb * C * itemsize
    # input double-buffer + native-dtype masks + f32 exp path ~= 10-12 tile-sized
    # buffers; keep headroom but stay well inside each generation's VMEM.
    vmem_cap = (96 << 20) if (gen and gen <= 6) else (48 << 20)
    vmem_limit = int(min(vmem_cap, max(16 << 20, 12 * block_bytes + (2 << 20))))

    partials = pl.pallas_call(
        functools.partial(_cls_loss_kernel, topk=tuple(topk), batch=B, block_rows=tb),
        out_shape=jax.ShapeDtypeStruct((num_tiles, _SUBLANES, _LANES), jnp.float32),
        grid=(num_tiles,),
        in_specs=[
            pl.BlockSpec((tb, C), lambda i: (i, 0)),   # logits, streamed in native dtype
            pl.BlockSpec((tb, 1), lambda i: (i, 0)),   # targets (tiny per-step DMA)
        ],
        out_specs=pl.BlockSpec((1, _SUBLANES, _LANES), lambda i: (i, 0, 0)),
        compiler_params=pltpu.CompilerParams(
            # Batch tiles are independent.
            # TODO(synk): switch to pltpu.CORE_PARALLEL on v7x (2 TCs/chip) once the
            # generation-gated codegen path has been validated on hardware.
            dimension_semantics=("parallel",),
            vmem_limit_bytes=vmem_limit,
        ),
        cost_estimate=pl.CostEstimate(
            flops=10 * B * C,
            transcendentals=B * C + 2 * B,
            bytes_accessed=B * C * itemsize + B * 4
            + num_tiles * _SUBLANES * _LANES * 4,
        ),
    )(output, target_2d)

    parts = partials[:, 0, :]                              # [num_tiles, 128]
    loss_dict = {"xe": jnp.sum(parts[:, 0]) * (1.0 / B)}
    for i, k in enumerate(topk):
        # shape [1], matching the torch accuracy output
        loss_dict["top%i" % k] = (jnp.sum(parts[:, 1 + i]) * (100.0 / B)).reshape(1)
    return loss_dict


def classification_loss_forward(output_dict, target_dict, topk=TOPK):
    """Mirrors ClassificationLoss.forward(output_dict, target_dict)."""
    return classification_loss(output_dict["output1"], target_dict["target1"], topk=topk)


def _reference(output, target, topk=TOPK):
    # pure-JAX reference for validation
    logits = output.astype(jnp.float32)
    B, C = logits.shape
    lse = jax.nn.logsumexp(logits, axis=-1)
    t_val = jnp.take_along_axis(logits, target[:, None].astype(jnp.int32), axis=-1)[:, 0]
    xe = jnp.mean(lse - t_val)
    rank = jnp.sum(logits > t_val[:, None], axis=-1)
    accs = {f"top{k}": jnp.sum(rank < k).astype(jnp.float32) * (100.0 / B) for k in topk}
    return xe, accs


def _run_case(B, C, dtype, seed):
    key = jax.random.PRNGKey(seed)
    k1, k2 = jax.random.split(key)
    logits = jax.random.normal(k1, (B, C), dtype=jnp.float32).astype(dtype)
    target = jax.random.randint(k2, (B,), 0, C, dtype=jnp.int32)

    loss_dict = classification_loss_forward({"output1": logits}, {"target1": target})
    loss_dict = jax.tree_util.tree_map(jax.block_until_ready, loss_dict)

    xe_ref, acc_ref = _reference(logits, target)
    # xe tolerance leaves margin for the MXU accumulation of the softmax
    # denominator (worst case ~0.4% if f32 dot accumulation is downgraded;
    # typically exact).  Top-k counts are exact by construction.
    np.testing.assert_allclose(
        np.asarray(loss_dict["xe"]), np.asarray(xe_ref), rtol=5e-3, atol=1e-5
    )
    for k in TOPK:
        np.testing.assert_allclose(
            np.asarray(loss_dict[f"top{k}"])[0],
            np.asarray(acc_ref[f"top{k}"]),
            rtol=1e-5,
            atol=1e-3,
        )


if __name__ == "__main__":
    # small f32 case (single tile)
    _run_case(B=8, C=16, dtype=jnp.float32, seed=0)
    # bf16 case with a batch that does not divide the tile (exercises padding mask + tiling)
    _run_case(B=20, C=50, dtype=jnp.bfloat16, seed=1)
    print("KERNEL_OK")
</pallas_src>

<mosaic_0001>
module attributes {stable_mosaic.version = 11 : i64} {
  func.func @_cls_loss_kernel(%arg0: i32, %arg1: memref<8x16xf32, #tpu.memory_space<vmem>>, %arg2: memref<8x1xi32, #tpu.memory_space<vmem>>, %arg3: memref<1x8x128xf32, #tpu.memory_space<vmem>>) attributes {dimension_semantics = [#tpu.dimension_semantics<parallel>], iteration_bounds = array<i64: 1>, scalar_prefetch = 0 : i64, scratch_operands = 0 : i64, tpu.core_type = #tpu.core_type<tc>, window_params = [{transform_indices = @transform_0, window_bounds = array<i64: 8, 16>}, {transform_indices = @transform_1, window_bounds = array<i64: 8, 1>}, {transform_indices = @transform_2, window_bounds = array<i64: 1, 8, 128>}]} {
    %c0 = arith.constant 0 : index
    %c0_0 = arith.constant 0 : index
    %0 = vector.load %arg1[%c0, %c0_0] : memref<8x16xf32, #tpu.memory_space<vmem>>, vector<8x16xf32>
    %c0_1 = arith.constant 0 : index
    %c0_2 = arith.constant 0 : index
    %1 = vector.load %arg2[%c0_1, %c0_2] : memref<8x1xi32, #tpu.memory_space<vmem>>, vector<8x1xi32>
    %c8_i32 = arith.constant 8 : i32
    %2 = arith.muli %arg0, %c8_i32 : i32
    %3 = tpu.iota {dimensions = array<i32: 0>} : vector<8x1xi32>
    %4 = vector.broadcast %2 : i32 to vector<8x1xi32>
    %5 = arith.addi %4, %3 : vector<8x1xi32>
    %c8_i32_3 = arith.constant 8 : i32
    %6 = vector.broadcast %c8_i32_3 : i32 to vector<8x1xi32>
    %7 = arith.cmpi slt, %5, %6 : vector<8x1xi32>
    %8 = tpu.iota {dimensions = array<i32: 1>} : vector<1x16xi32>
    %9 = vector.broadcast %8 : vector<1x16xi32> to vector<8x16xi32>
    %10 = vector.broadcast %1 : vector<8x1xi32> to vector<8x16xi32>
    %11 = arith.cmpi eq, %9, %10 : vector<8x16xi32>
    %cst = arith.constant -3.40282347E+38 : f32
    %12 = vector.broadcast %cst : f32 to vector<8x16xf32>
    %13 = arith.select %11, %0, %12 : vector<8x16xi1>, vector<8x16xf32>
    %cst_4 = arith.constant dense<0xFF800000> : vector<8xf32>
    %14 = vector.multi_reduction <maximumf>, %13, %cst_4 [1] : vector<8x16xf32> to vector<8xf32>
    %15 = vector.shape_cast %14 : vector<8xf32> to vector<8x1xf32>
    %16 = vector.broadcast %15 : vector<8x1xf32> to vector<8x16xf32>
    %17 = arith.cmpf ogt, %0, %16 : vector<8x16xf32>
    %18 = arith.extui %17 : vector<8x16xi1> to vector<8x16xi32>
    %19 = arith.sitofp %18 : vector<8x16xi32> to vector<8x16xf32>
    %20 = arith.truncf %19 : vector<8x16xf32> to vector<8x16xbf16>
    %cst_5 = arith.constant 1.000000e+00 : bf16
    %21 = vector.broadcast %cst_5 : bf16 to vector<16x1xbf16>
    %cst_6 = arith.constant dense<0.000000e+00> : vector<8x1xf32>
    %22 = tpu.matmul %20, %21, %cst_6 {dimension_numbers = #tpu.dot_dimension_numbers<[1], [0], [0], [1], [0, 0, 1, 1], [], []>} : vector<8x16xbf16>, vector<16x1xbf16>, vector<8x1xf32> -> vector<8x1xf32>
    %cst_7 = arith.constant dense<0xFF800000> : vector<8xf32>
    %23 = vector.multi_reduction <maximumf>, %0, %cst_7 [1] : vector<8x16xf32> to vector<8xf32>
    %24 = vector.shape_cast %23 : vector<8xf32> to vector<8x1xf32>
    %25 = vector.broadcast %24 : vector<8x1xf32> to vector<8x16xf32>
    %26 = arith.subf %0, %25 : vector<8x16xf32>
    %27 = math.exp %26 : vector<8x16xf32>
    %cst_8 = arith.constant 1.000000e+00 : f32
    %28 = vector.broadcast %cst_8 : f32 to vector<16x1xf32>
    %cst_9 = arith.constant dense<0.000000e+00> : vector<8x1xf32>
    %29 = tpu.matmul %27, %28, %cst_9 {dimension_numbers = #tpu.dot_dimension_numbers<[1], [0], [0], [1], [0, 0, 1, 1], [], []>} : vector<8x16xf32>, vector<16x1xf32>, vector<8x1xf32> -> vector<8x1xf32>
    %30 = math.log %29 : vector<8x1xf32>
    %31 = arith.addf %30, %24 : vector<8x1xf32>
    %32 = arith.subf %31, %15 : vector<8x1xf32>
    %cst_10 = arith.constant 0.000000e+00 : f32
    %33 = vector.broadcast %cst_10 : f32 to vector<8x1xf32>
    %34 = arith.select %7, %32, %33 : vector<8x1xi1>, vector<8x1xf32>
    %35 = vector.shape_cast %34 : vector<8x1xf32> to vector<1x8x1xf32>
    %cst_11 = arith.constant dense<0.000000e+00> : vector<1xf32>
    %36 = vector.multi_reduction <add>, %35, %cst_11 [1, 2] : vector<1x8x1xf32> to vector<1xf32>
    %37 = vector.shape_cast %36 : vector<1xf32> to vector<1x1x1xf32>
    %38 = vector.extract %37[0, 0, 0] : f32 from vector<1x1x1xf32>
    %39 = tpu.iota {dimensions = array<i32: 1>} : vector<8x128xi32>
    %c0_i32 = arith.constant 0 : i32
    %40 = vector.broadcast %c0_i32 : i32 to vector<8x128xi32>
    %41 = arith.cmpi eq, %39, %40 : vector<8x128xi32>
    %cst_12 = arith.constant 0.000000e+00 : f32
    %42 = vector.broadcast %38 : f32 to vector<8x128xf32>
    %43 = vector.broadcast %cst_12 : f32 to vector<8x128xf32>
    %44 = arith.select %41, %42, %43 : vector<8x128xi1>, vector<8x128xf32>
    %cst_13 = arith.constant 1.000000e+00 : f32
    %45 = vector.broadcast %cst_13 : f32 to vector<8x1xf32>
    %46 = arith.cmpf olt, %22, %45 : vector<8x1xf32>
    %47 = arith.andi %7, %46 : vector<8x1xi1>
    %cst_14 = arith.constant 1.000000e+00 : f32
    %cst_15 = arith.constant 0.000000e+00 : f32
    %48 = vector.broadcast %cst_14 : f32 to vector<8x1xf32>
    %49 = vector.broadcast %cst_15 : f32 to vector<8x1xf32>
    %50 = arith.select %47, %48, %49 : vector<8x1xi1>, vector<8x1xf32>
    %51 = vector.shape_cast %50 : vector<8x1xf32> to vector<1x8x1xf32>
    %cst_16 = arith.constant dense<0.000000e+00> : vector<1xf32>
    %52 = vector.multi_reduction <add>, %51, %cst_16 [1, 2] : vector<1x8x1xf32> to vector<1xf32>
    %53 = vector.shape_cast %52 : vector<1xf32> to vector<1x1x1xf32>
    %54 = vector.extract %53[0, 0, 0] : f32 from vector<1x1x1xf32>
    %c1_i32 = arith.constant 1 : i32
    %55 = vector.broadcast %c1_i32 : i32 to vector<8x128xi32>
    %56 = arith.cmpi eq, %39, %55 : vector<8x128xi32>
    %cst_17 = arith.constant 0.000000e+00 : f32
    %57 = vector.broadcast %54 : f32 to vector<8x128xf32>
    %58 = vector.broadcast %cst_17 : f32 to vector<8x128xf32>
    %59 = arith.select %56, %57, %58 : vector<8x128xi1>, vector<8x128xf32>
    %60 = arith.addf %44, %59 : vector<8x128xf32>
    %cst_18 = arith.constant 2.000000e+00 : f32
    %61 = vector.broadcast %cst_18 : f32 to vector<8x1xf32>
    %62 = arith.cmpf olt, %22, %61 : vector<8x1xf32>
    %63 = arith.andi %7, %62 : vector<8x1xi1>
    %cst_19 = arith.constant 1.000000e+00 : f32
    %cst_20 = arith.constant 0.000000e+00 : f32
    %64 = vector.broadcast %cst_19 : f32 to vector<8x1xf32>
    %65 = vector.broadcast %cst_20 : f32 to vector<8x1xf32>
    %66 = arith.select %63, %64, %65 : vector<8x1xi1>, vector<8x1xf32>
    %67 = vector.shape_cast %66 : vector<8x1xf32> to vector<1x8x1xf32>
    %cst_21 = arith.constant dense<0.000000e+00> : vector<1xf32>
    %68 = vector.multi_reduction <add>, %67, %cst_21 [1, 2] : vector<1x8x1xf32> to vector<1xf32>
    %69 = vector.shape_cast %68 : vector<1xf32> to vector<1x1x1xf32>
    %70 = vector.extract %69[0, 0, 0] : f32 from vector<1x1x1xf32>
    %c2_i32 = arith.constant 2 : i32
    %71 = vector.broadcast %c2_i32 : i32 to vector<8x128xi32>
    %72 = arith.cmpi eq, %39, %71 : vector<8x128xi32>
    %cst_22 = arith.constant 0.000000e+00 : f32
    %73 = vector.broadcast %70 : f32 to vector<8x128xf32>
    %74 = vector.broadcast %cst_22 : f32 to vector<8x128xf32>
    %75 = arith.select %72, %73, %74 : vector<8x128xi1>, vector<8x128xf32>
    %76 = arith.addf %60, %75 : vector<8x128xf32>
    %cst_23 = arith.constant 3.000000e+00 : f32
    %77 = vector.broadcast %cst_23 : f32 to vector<8x1xf32>
    %78 = arith.cmpf olt, %22, %77 : vector<8x1xf32>
    %79 = arith.andi %7, %78 : vector<8x1xi1>
    %cst_24 = arith.constant 1.000000e+00 : f32
    %cst_25 = arith.constant 0.000000e+00 : f32
    %80 = vector.broadcast %cst_24 : f32 to vector<8x1xf32>
    %81 = vector.broadcast %cst_25 : f32 to vector<8x1xf32>
    %82 = arith.select %79, %80, %81 : vector<8x1xi1>, vector<8x1xf32>
    %83 = vector.shape_cast %82 : vector<8x1xf32> to vector<1x8x1xf32>
    %cst_26 = arith.constant dense<0.000000e+00> : vector<1xf32>
    %84 = vector.multi_reduction <add>, %83, %cst_26 [1, 2] : vector<1x8x1xf32> to vector<1xf32>
    %85 = vector.shape_cast %84 : vector<1xf32> to vector<1x1x1xf32>
    %86 = vector.extract %85[0, 0, 0] : f32 from vector<1x1x1xf32>
    %c3_i32 = arith.constant 3 : i32
    %87 = vector.broadcast %c3_i32 : i32 to vector<8x128xi32>
    %88 = arith.cmpi eq, %39, %87 : vector<8x128xi32>
    %cst_27 = arith.constant 0.000000e+00 : f32
    %89 = vector.broadcast %86 : f32 to vector<8x128xf32>
    %90 = vector.broadcast %cst_27 : f32 to vector<8x128xf32>
    %91 = arith.select %88, %89, %90 : vector<8x128xi1>, vector<8x128xf32>
    %92 = arith.addf %76, %91 : vector<8x128xf32>
    %93 = vector.shape_cast %92 : vector<8x128xf32> to vector<1x8x128xf32>
    %c0_28 = arith.constant 0 : index
    %c0_29 = arith.constant 0 : index
    %c0_30 = arith.constant 0 : index
    %94 = vector.load %arg3[%c0_28, %c0_29, %c0_30] : memref<1x8x128xf32, #tpu.memory_space<vmem>>, vector<1x8x128xf32>
    tpu.vector_store %arg3[%c0_28, %c0_29, %c0_30], %93 {strides = array<i32>} : memref<1x8x128xf32, #tpu.memory_space<vmem>>, vector<1x8x128xf32>,
    return
  }
  func.func @transform_0(%arg0: i32) -> (i32, i32) {
    %c0_i32 = arith.constant 0 : i32
    %c0_i32_0 = arith.constant 0 : i32
    return %arg0, %c0_i32 : i32, i32
  }
  func.func @transform_1(%arg0: i32) -> (i32, i32) {
    %c0_i32 = arith.constant 0 : i32
    %c0_i32_0 = arith.constant 0 : i32
    return %arg0, %c0_i32 : i32, i32
  }
  func.func @transform_2(%arg0: i32) -> (i32, i32, i32) {
    %c0_i32 = arith.constant 0 : i32
    %c0_i32_0 = arith.constant 0 : i32
    %c0_i32_1 = arith.constant 0 : i32
    return %arg0, %c0_i32, %c0_i32_0 : i32, i32, i32
  }
}

</mosaic_0001>

<llo_original>
// kernel: tpu_custom_call.1
$region0: #{tpu_custom_call.1}
  #allocation0 [shape = 'u32[]', space=smem, size = 0x4, offset = 0x4, fixed_abs, tag = 'smem constant byte address 0x4 - core index']
  #allocation1 [shape = 'u32[144,128]{1,0:T(1,128)}', space=vmem, size = 0x12000, scoped, tag = 'internal scratch']
  %s0 = inlined_call_operand.vmem [shape: f32[8,16], index: 0, kind: input, shape index: {}]
  %s1 = inlined_call_operand.vmem [shape: s32[8,1], index: 1, kind: input, shape index: {}]
  %s2 = inlined_call_operand.hbm [shape: f32[1,8,128], index: 2, kind: output, shape index: {}]
  %s3 = sld [smem:[#allocation0]]
  $region18: #{tpu_custom_call.1} parent=0
    _
  %s5 = ssub.s32 1, %s3
  %s6 = scalar_select 0, %s5, %s3
  $region1: #{tpu_custom_call.1} parent=0
    #allocation2 [shape = 'u8[4096]{0}', space=vmem, size = 0x1000, scoped, tag = 'output window, operand 0, single buffered']
    #allocation3 [shape = 's32[1]{0}', space=sflag, size = 0x4, scoped, tag = 'scoped memory for tpu_custom_call.1']
    %7 = vsyncpa [#allocation3], 0
    // Predicated region
    $region2: #{tpu_custom_call.1} parent=1 // pred_check
      _
    $region3: #{tpu_custom_call.1} parent=1 // pred_check_branch
      %9 = sbr.rel (0) target = $region5
    $region4: #{tpu_custom_call.1} parent=1 // pred_region
      _
    $region5: #{tpu_custom_call.1} parent=1 // pred_fallthru
      _
    // Predicated region
    $region6: #{tpu_custom_call.1} parent=1 // pred_check
      _
    $region7: #{tpu_custom_call.1} parent=1 // pred_check_branch
      %11 = sbr.rel (0) target = $region9
    $region8: #{tpu_custom_call.1} parent=1 // pred_region
      _
    $region9: #{tpu_custom_call.1} parent=1 // pred_fallthru
      _
    %v14 = vld [vmem:[%s0] sm:$0xff]
    %v15 = vld [vmem:[%s1] sm:$0xff]
    %s16 = smul.u32 0, 8
    %v17 = vlaneseq
    %v18 = vshrl.u32 %v17, 7
    %v19 = vstv %s16
    %v20 = vadd.s32 %v19, %v18
    %vm21 = vcmp.lt.s32.totalorder %v20, 8
    %v22 = vlaneseq
    %v23 = vand.u32 %v22, 127
    %24 = vset.pattern.permute.xlu0 0
    %25 = vperm.xlu0 %24, %v15
    %v26 = vpop.permute.xlu0 %25
    %vm27 = vcmp.eq.s32.totalorder %v23, %v26
    %v28 = vsel %vm27, %v14, -3.4028235e+38
    %vm29 = vcmask 130048
    %v30 = vsel %vm29, %v28, -inf
    %31 = vmax.xlane.f32.xlu0 %v30
    %v32 = vpop.xlane.xlu0 %31
    %vm33 = vcmp.gt.f32.partialorder %v14, %v32
    %v34 = vsel %vm33, 1, 0
    %v35 = vcvt.s32.f32 %v34
    %v36 = vpack.c.bf16 %v35, %v35
    %v38 = vsel %vm29, %v36, 0
    %40 = vmatprep.subr.bf16.mxu0 0
    %41 = vmatpush1.bf16.msra.mxu0 1065369472
    %42 = vmatprep.subr.bf16.mxu0 0
    %43 = vmatpush1.bf16.msra.mxu0 0
    %44 = vmatprep.subr.bf16.mxu0 0
    %45 = vmatpush1.bf16.msra.mxu0 0
    %46 = vmatprep.subr.bf16.mxu0 0
    %47 = vmatpush1.bf16.msra.mxu0 0
    %48 = vmatprep.subr.bf16.mxu0 0
    %49 = vmatpush1.bf16.msra.mxu0 0
    %50 = vmatprep.subr.bf16.mxu0 0
    %51 = vmatpush1.bf16.msra.mxu0 0
    %52 = vmatprep.subr.bf16.mxu0 0
    %53 = vmatpush1.bf16.msra.mxu0 0
    %54 = vmatprep.subr.bf16.mxu0 0
    %55 = vmatpush1.bf16.msra.mxu0 0
    %56 = vmatprep.subr.bf16.mxu0 0
    %57 = vmatpush1.bf16.msra.mxu0 0
    %58 = vmatprep.subr.bf16.mxu0 0
    %59 = vmatpush1.bf16.msra.mxu0 0
    %60 = vmatprep.subr.bf16.mxu0 0
    %61 = vmatpush1.bf16.msra.mxu0 0
    %62 = vmatprep.subr.bf16.mxu0 0
    %63 = vmatpush1.bf16.msra.mxu0 0
    %64 = vmatprep.subr.bf16.mxu0 0
    %65 = vmatpush1.bf16.msra.mxu0 0
    %66 = vmatprep.subr.bf16.mxu0 0
    %67 = vmatpush1.bf16.msra.mxu0 0
    %68 = vmatprep.subr.bf16.mxu0 0
    %69 = vmatpush1.bf16.msra.mxu0 0
    %70 = vmatprep.subr.bf16.mxu0 0
    %71 = vmatpush1.bf16.msra.mxu0 0
    %72 = vmatprep.mubr.bf16.mxu0 0
    %73 = vmatmul.mubr.bf16.gmra.mrb[0].mxu0 %v38
    %v74 = vpop.f32.mrb[0].mxu0
    %v75 = vadd.f32 0.0, %v74
    %v76 = vpop.f32.mrb[0].mxu0
    %v77 = vpop.f32.mrb[0].mxu0
    %v78 = vpop.f32.mrb[0].mxu0
    %79 = vdwg.mxu0
    %v80 = vsel %vm29, %v14, -inf
    %81 = vmax.xlane.f32.xlu0 %v80
    %v82 = vpop.xlane.xlu0 %81
    %v83 = vsub.f32 %v14, %v82
    %v84 = vmul.f32 %v83, 1.442695
    %v85 = vpow.pop %v84
    %v87 = vsel %vm29, %v85, 0
    %89 = vmatprep.subr.mxu0 0.0
    %90 = vmatpush1.msra.mxu0 1.0
    %91 = vmatprep.subr.mxu0 0.0
    %92 = vmatpush1.msra.mxu0 1.0
    %93 = vmatprep.subr.mxu0 0.0
    %94 = vmatpush1.msra.mxu0 0.0
    %95 = vmatprep.subr.mxu0 0.0
    %96 = vmatpush1.msra.mxu0 0.0
    %97 = vmatprep.subr.mxu0 0.0
    %98 = vmatpush1.msra.mxu0 0.0
    %99 = vmatprep.subr.mxu0 0.0
    %100 = vmatpush1.msra.mxu0 0.0
    %101 = vmatprep.subr.mxu0 0.0
    %102 = vmatpush1.msra.mxu0 0.0
    %103 = vmatprep.subr.mxu0 0.0
    %104 = vmatpush1.msra.mxu0 0.0
    %105 = vmatprep.subr.mxu0 0.0
    %106 = vmatpush1.msra.mxu0 0.0
    %107 = vmatprep.subr.mxu0 0.0
    %108 = vmatpush1.msra.mxu0 0.0
    %109 = vmatprep.subr.mxu0 0.0
    %110 = vmatpush1.msra.mxu0 0.0
    %111 = vmatprep.subr.mxu0 0.0
    %112 = vmatpush1.msra.mxu0 0.0
    %113 = vmatprep.subr.mxu0 0.0
    %114 = vmatpush1.msra.mxu0 0.0
    %115 = vmatprep.subr.mxu0 0.0
    %116 = vmatpush1.msra.mxu0 0.0
    %117 = vmatprep.subr.mxu0 0.0
    %118 = vmatpush1.msra.mxu0 0.0
    %119 = vmatprep.subr.mxu0 0.0
    %120 = vmatpush1.msra.mxu0 0.0
    %121 = vmatprep.subr.mxu0 0.0
    %122 = vmatpush1.msra.mxu0 0.0
    %123 = vmatprep.subr.mxu0 0.0
    %124 = vmatpush1.msra.mxu0 0.0
    %125 = vmatprep.subr.mxu0 0.0
    %126 = vmatpush1.msra.mxu0 0.0
    %127 = vmatprep.subr.mxu0 0.0
    %128 = vmatpush1.msra.mxu0 0.0
    %129 = vmatprep.subr.mxu0 0.0
    %130 = vmatpush1.msra.mxu0 0.0
    %131 = vmatprep.subr.mxu0 0.0
    %132 = vmatpush1.msra.mxu0 0.0
    %133 = vmatprep.subr.mxu0 0.0
    %134 = vmatpush1.msra.mxu0 0.0
    %135 = vmatprep.subr.mxu0 0.0
    %136 = vmatpush1.msra.mxu0 0.0
    %137 = vmatprep.subr.mxu0 0.0
    %138 = vmatpush1.msra.mxu0 0.0
    %139 = vmatprep.subr.mxu0 0.0
    %140 = vmatpush1.msra.mxu0 0.0
    %141 = vmatprep.subr.mxu0 0.0
    %142 = vmatpush1.msra.mxu0 0.0
    %143 = vmatprep.subr.mxu0 0.0
    %144 = vmatpush1.msra.mxu0 0.0
    %145 = vmatprep.subr.mxu0 0.0
    %146 = vmatpush1.msra.mxu0 0.0
    %147 = vmatprep.subr.mxu0 0.0
    %148 = vmatpush1.msra.mxu0 0.0
    %149 = vmatprep.subr.mxu0 0.0
    %150 = vmatpush1.msra.mxu0 0.0
    %151 = vmatprep.subr.mxu0 0.0
    %152 = vmatpush1.msra.mxu0 0.0
    %153 = vmatprep.mubr.f32.mxu0 0.0
    %154 = vmatmul.mubr.f32.gmra.mrb[0].mxu0 %v87
    %v155 = vpop.f32.mrb[0].mxu0
    %v156 = vadd.f32 0.0, %v155
    %v157 = vpop.f32.mrb[0].mxu0
    %158 = vdwg.mxu0
    %v159 = vlog2.pop %v156
    %v160 = vmul.f32 %v159, 0.6931472
    %v161 = vadd.f32 %v160, %v82
    %v162 = vsub.f32 %v161, %v32
    %v163 = vsel %vm21, %v162, 0.0
    %vm164 = vcmask 7168
    %v165 = vsel %vm164, %v163, 0.0
    %166 = vadd.xlane.f32.xlu0 %v165
    %v167 = vpop.xlane.xlu0 %166
    %v168 = vrot.slane %v167, 4
    %v169 = vadd.f32 %v167, %v168
    %v170 = vrot.slane %v169, 2
    %v171 = vadd.f32 %v169, %v170
    %v172 = vrot.slane %v171, 1
    %v173 = vadd.f32 %v171, %v172
    %s174 = vtos %v173
    %vm175 = vcmp.eq.s32.totalorder %v23, 0
    %v176 = vstv %s174
    %v177 = vsel %vm175, %v176, 0.0
    %vm178 = vcmp.lt.f32.partialorder %v75, 1.0
    %vm179 = vmand %vm21, %vm178
    %v180 = vsel %vm179, 1.0, 0.0
    %v181 = vsel %vm164, %v180, 0.0
    %182 = vadd.xlane.f32.xlu0 %v181
    %v183 = vpop.xlane.xlu0 %182
    %v184 = vrot.slane %v183, 4
    %v185 = vadd.f32 %v183, %v184
    %v186 = vrot.slane %v185, 2
    %v187 = vadd.f32 %v185, %v186
    %v188 = vrot.slane %v187, 1
    %v189 = vadd.f32 %v187, %v188
    %s190 = vtos %v189
    %vm191 = vcmp.eq.s32.totalorder %v23, 1
    %v192 = vstv %s190
    %v193 = vsel %vm191, %v192, 0.0
    %v194 = vadd.f32 %v177, %v193
    %vm195 = vcmp.lt.f32.partialorder %v75, 2.0
    %vm196 = vmand %vm21, %vm195
    %v197 = vsel %vm196, 1.0, 0.0
    %v198 = vsel %vm164, %v197, 0.0
    %199 = vadd.xlane.f32.xlu0 %v198
    %v200 = vpop.xlane.xlu0 %199
    %v201 = vrot.slane %v200, 4
    %v202 = vadd.f32 %v200, %v201
    %v203 = vrot.slane %v202, 2
    %v204 = vadd.f32 %v202, %v203
    %v205 = vrot.slane %v204, 1
    %v206 = vadd.f32 %v204, %v205
    %s207 = vtos %v206
    %vm208 = vcmp.eq.s32.totalorder %v23, 2
    %v209 = vstv %s207
    %v210 = vsel %vm208, %v209, 0.0
    %v211 = vadd.f32 %v194, %v210
    %vm212 = vcmp.lt.f32.partialorder %v75, 3.0
    %vm213 = vmand %vm21, %vm212
    %v214 = vsel %vm213, 1.0, 0.0
    %v215 = vsel %vm164, %v214, 0.0
    %216 = vadd.xlane.f32.xlu0 %v215
    %v217 = vpop.xlane.xlu0 %216
    %v218 = vrot.slane %v217, 4
    %v219 = vadd.f32 %v217, %v218
    %v220 = vrot.slane %v219, 2
    %v221 = vadd.f32 %v219, %v220
    %v222 = vrot.slane %v221, 1
    %v223 = vadd.f32 %v221, %v222
    %s224 = vtos %v223
    %vm225 = vcmp.eq.s32.totalorder %v23, 3
    %v226 = vstv %s224
    %v227 = vsel %vm225, %v226, 0.0
    %v228 = vadd.f32 %v211, %v227
    %229 = vst [vmem:[#allocation2] sm:$0xff] %v228
    // Predicated region
    $region10: #{tpu_custom_call.1} parent=1 // pred_check
      _
    $region11: #{tpu_custom_call.1} parent=1 // pred_check_branch
      %231 = sbr.rel (0) target = $region13
    $region12: #{tpu_custom_call.1} parent=1 // pred_region
      %s233 = ssub.s32 128, 128
      %234 = vsyncadd [#allocation3], %s233
      %s236 = sshll.u32 [#allocation2], 4
      %s237 = int_to_ptr.vmem [resolvable:$true] %s236
      %239 = dma.vmem_to_hbm [thread:$0]  %s237, 128, %s2, [#allocation3]
    $region13: #{tpu_custom_call.1} parent=1 // pred_fallthru
      _
    // Predicated region
    $region14: #{tpu_custom_call.1} parent=1 // pred_check
      _
    $region15: #{tpu_custom_call.1} parent=1 // pred_check_branch
      %241 = sbr.rel (0) target = $region17
    $region16: #{tpu_custom_call.1} parent=1 // pred_region
      %242 = dma.done [#allocation3], 128
    $region17: #{tpu_custom_call.1} parent=1 // pred_fallthru
      _
    %243 = vsyncpa [#allocation3], 1

</llo_original>
